<compile_context>
chip_gen: v5e
topology: v5e:2x2
jax: 0.10.0
libtpu: 0.0.40
codegen_flags: <defaults>
</compile_context>

<pallas_src>
import jax
import jax.numpy as jnp
from jax.experimental import pallas as pl
from jax.experimental.pallas import tpu as pltpu

HIDDEN_LAYER = 256
IN_FEATURES = 4
OUT_FEATURES = 2

LANE = 128                   # TPU lane width; batch lives on the lane axis
MAX_BATCH_TILE = 4096        # multiple of LANE; ~few-MiB working set per step
MIN_BATCH_FOR_SPLIT = 1024   # force >=2 grid steps above this (v7x megacore)


def _round_up(n, m):
    return ((n + m - 1) // m) * m


def _mlp_kernel(xT_ref, w1_ref, b1_ref, w2_ref, b2_ref, oT_ref):
    # xT: (4, tb), w1T: (256, 4), b1: (256, 1), w2T: (2, 256), b2: (2, 1)
    # Layer 1 on the MXU: (256, 4) @ (4, tb) -> (256, tb); batch on lanes.
    h = jnp.dot(w1_ref[...], xT_ref[...], preferred_element_type=jnp.float32)
    # Bias + ReLU on the VPU (b1 broadcasts along lanes).
    h = jnp.maximum(h + b1_ref[...], 0.0)
    # Layer 2 on the MXU: (2, 256) @ (256, tb) -> (2, tb).
    y = jnp.dot(w2_ref[...], h, preferred_element_type=jnp.float32)
    oT_ref[...] = (y + b2_ref[...]).astype(oT_ref.dtype)


def network_forward(x, w1T, b1, w2T, b2):
    """x: [B, 4] f32. w1T: [256, 4], b1: [256, 1], w2T: [2, 256], b2: [2, 1].

    Returns [B, 2] = Linear2(relu(Linear1(x))), matching the PyTorch module
    (weights are stored in PyTorch's [out_features, in_features] layout).
    """
    batch = x.shape[0]

    # --- Batch tiling: batch sits on the lane axis -> tiles are multiples of 128.
    batch128 = _round_up(batch, LANE)
    num_tiles = pl.cdiv(batch128, MAX_BATCH_TILE)
    if num_tiles < 2 and batch128 >= MIN_BATCH_FOR_SPLIT:
        num_tiles = 2  # >=2 independent grid steps -> both TCs on v7x megacore
    tb = _round_up(pl.cdiv(batch128, num_tiles), LANE)   # even split, no 2x pad
    num_tiles = pl.cdiv(batch128, tb)
    batch_pad = tb * num_tiles

    # Lane-dense layout: batch on the last (lane) axis for both x and y.
    xT = x.T  # (4, B)
    if batch_pad != batch:
        xT = jnp.pad(xT, ((0, 0), (0, batch_pad - batch)))

    flops = 2 * batch_pad * (IN_FEATURES * HIDDEN_LAYER
                             + HIDDEN_LAYER * OUT_FEATURES)
    bytes_accessed = (
        batch_pad * (IN_FEATURES + OUT_FEATURES) * 4
        + (IN_FEATURES * HIDDEN_LAYER + HIDDEN_LAYER
           + HIDDEN_LAYER * OUT_FEATURES + OUT_FEATURES) * 4
    )

    outT = pl.pallas_call(
        _mlp_kernel,
        out_shape=jax.ShapeDtypeStruct((OUT_FEATURES, batch_pad), jnp.float32),
        grid=(num_tiles,),
        in_specs=[
            # xT: pipelined lane-dense batch tiles.
            pl.BlockSpec((IN_FEATURES, tb), lambda i: (0, i)),
            # Weights/biases: constant index_map -> resident across the grid.
            pl.BlockSpec((HIDDEN_LAYER, IN_FEATURES), lambda i: (0, 0)),
            pl.BlockSpec((HIDDEN_LAYER, 1), lambda i: (0, 0)),
            pl.BlockSpec((OUT_FEATURES, HIDDEN_LAYER), lambda i: (0, 0)),
            pl.BlockSpec((OUT_FEATURES, 1), lambda i: (0, 0)),
        ],
        out_specs=pl.BlockSpec((OUT_FEATURES, tb), lambda i: (0, i)),
        compiler_params=pltpu.CompilerParams(
            # Batch tiles are independent -> megacore sharding on v7x.
            dimension_semantics=("parallel",),
            # Large tiles also fit v5e's smaller scoped-VMEM default.
            vmem_limit_bytes=32 * 1024 * 1024,
        ),
        cost_estimate=pl.CostEstimate(
            flops=flops,
            transcendentals=0,
            bytes_accessed=bytes_accessed,
        ),
    )(xT, w1T, b1, w2T, b2)

    # Slice off batch padding and return in the module's [B, 2] layout.
    return outT[:, :batch].T


def init_params(key):
    """Deterministic init matching nn.Linear (uniform +/- 1/sqrt(fan_in)).
    Weights are kept in PyTorch's [out_features, in_features] layout; biases
    are stored as column vectors [out_features, 1]."""
    k1, k2, k3, k4 = jax.random.split(key, 4)
    bound1 = 1.0 / jnp.sqrt(float(IN_FEATURES))
    bound2 = 1.0 / jnp.sqrt(float(HIDDEN_LAYER))
    w1T = jax.random.uniform(k1, (HIDDEN_LAYER, IN_FEATURES), jnp.float32,
                             -bound1, bound1)
    b1 = jax.random.uniform(k2, (HIDDEN_LAYER, 1), jnp.float32, -bound1, bound1)
    w2T = jax.random.uniform(k3, (OUT_FEATURES, HIDDEN_LAYER), jnp.float32,
                             -bound2, bound2)
    b2 = jax.random.uniform(k4, (OUT_FEATURES, 1), jnp.float32, -bound2, bound2)
    return w1T, b1, w2T, b2


if __name__ == "__main__":
    key = jax.random.PRNGKey(0)
    k_x, k_p = jax.random.split(key)
    w1T, b1, w2T, b2 = init_params(k_p)

    def reference(xv):
        h = jnp.maximum(xv @ w1T.T + b1[:, 0], 0.0)
        return h @ w2T.T + b2[:, 0]

    # Small, even batch (single tile).
    batch = 8
    x = jax.random.normal(k_x, (batch, IN_FEATURES), dtype=jnp.float32)
    out = jax.block_until_ready(network_forward(x, w1T, b1, w2T, b2))
    assert out.shape == (batch, OUT_FEATURES)
    assert jnp.allclose(out, reference(x), atol=1e-4, rtol=1e-4)

    # Ragged batch (not a multiple of 128) exercises the lane-padding path.
    batch2 = 37
    x2 = jax.random.normal(k_x, (batch2, IN_FEATURES), dtype=jnp.float32)
    out2 = jax.block_until_ready(network_forward(x2, w1T, b1, w2T, b2))
    assert out2.shape == (batch2, OUT_FEATURES)
    assert jnp.allclose(out2, reference(x2), atol=1e-4, rtol=1e-4)

    # Moderate batch exercises the multi-step (>=2 tiles) grid path.
    batch3 = 2000
    x3 = jax.random.normal(k_x, (batch3, IN_FEATURES), dtype=jnp.float32)
    out3 = jax.block_until_ready(network_forward(x3, w1T, b1, w2T, b2))
    assert out3.shape == (batch3, OUT_FEATURES)
    assert jnp.allclose(out3, reference(x3), atol=1e-4, rtol=1e-4)

    print("KERNEL_OK")
</pallas_src>

<mosaic_0001>
module attributes {stable_mosaic.version = 11 : i64} {
  func.func @_mlp_kernel(%arg0: i32, %arg1: memref<4x128xf32, #tpu.memory_space<vmem>>, %arg2: memref<256x4xf32, #tpu.memory_space<vmem>>, %arg3: memref<256x1xf32, #tpu.memory_space<vmem>>, %arg4: memref<2x256xf32, #tpu.memory_space<vmem>>, %arg5: memref<2x1xf32, #tpu.memory_space<vmem>>, %arg6: memref<2x128xf32, #tpu.memory_space<vmem>>) attributes {dimension_semantics = [#tpu.dimension_semantics<parallel>], iteration_bounds = array<i64: 1>, scalar_prefetch = 0 : i64, scratch_operands = 0 : i64, tpu.core_type = #tpu.core_type<tc>, window_params = [{transform_indices = @transform_0, window_bounds = array<i64: 4, 128>}, {pipeline_mode = #tpu.pipeline_mode<synchronous>, transform_indices = @transform_1, window_bounds = array<i64: 256, 4>}, {pipeline_mode = #tpu.pipeline_mode<synchronous>, transform_indices = @transform_2, window_bounds = array<i64: 256, 1>}, {pipeline_mode = #tpu.pipeline_mode<synchronous>, transform_indices = @transform_3, window_bounds = array<i64: 2, 256>}, {pipeline_mode = #tpu.pipeline_mode<synchronous>, transform_indices = @transform_4, window_bounds = array<i64: 2, 1>}, {transform_indices = @transform_5, window_bounds = array<i64: 2, 128>}]} {
    %c0 = arith.constant 0 : index
    %c0_0 = arith.constant 0 : index
    %0 = vector.load %arg2[%c0, %c0_0] : memref<256x4xf32, #tpu.memory_space<vmem>>, vector<256x4xf32>
    %c0_1 = arith.constant 0 : index
    %c0_2 = arith.constant 0 : index
    %1 = vector.load %arg1[%c0_1, %c0_2] : memref<4x128xf32, #tpu.memory_space<vmem>>, vector<4x128xf32>
    %cst = arith.constant dense<0.000000e+00> : vector<256x128xf32>
    %2 = tpu.matmul %0, %1, %cst {dimension_numbers = #tpu.dot_dimension_numbers<[1], [0], [0], [1], [0, 0, 1, 1], [], []>} : vector<256x4xf32>, vector<4x128xf32>, vector<256x128xf32> -> vector<256x128xf32>
    %c0_3 = arith.constant 0 : index
    %c0_4 = arith.constant 0 : index
    %3 = vector.load %arg3[%c0_3, %c0_4] : memref<256x1xf32, #tpu.memory_space<vmem>>, vector<256x1xf32>
    %4 = vector.broadcast %3 : vector<256x1xf32> to vector<256x128xf32>
    %5 = arith.addf %2, %4 : vector<256x128xf32>
    %cst_5 = arith.constant 0.000000e+00 : f32
    %6 = vector.broadcast %cst_5 : f32 to vector<256x128xf32>
    %7 = arith.maximumf %5, %6 : vector<256x128xf32>
    %c0_6 = arith.constant 0 : index
    %c0_7 = arith.constant 0 : index
    %8 = vector.load %arg4[%c0_6, %c0_7] : memref<2x256xf32, #tpu.memory_space<vmem>>, vector<2x256xf32>
    %cst_8 = arith.constant dense<0.000000e+00> : vector<2x128xf32>
    %9 = tpu.matmul %8, %7, %cst_8 {dimension_numbers = #tpu.dot_dimension_numbers<[1], [0], [0], [1], [0, 0, 1, 1], [], []>} : vector<2x256xf32>, vector<256x128xf32>, vector<2x128xf32> -> vector<2x128xf32>
    %c0_9 = arith.constant 0 : index
    %c0_10 = arith.constant 0 : index
    %10 = vector.load %arg5[%c0_9, %c0_10] : memref<2x1xf32, #tpu.memory_space<vmem>>, vector<2x1xf32>
    %11 = vector.broadcast %10 : vector<2x1xf32> to vector<2x128xf32>
    %12 = arith.addf %9, %11 : vector<2x128xf32>
    %c0_11 = arith.constant 0 : index
    %c0_12 = arith.constant 0 : index
    %13 = vector.load %arg6[%c0_11, %c0_12] : memref<2x128xf32, #tpu.memory_space<vmem>>, vector<2x128xf32>
    tpu.vector_store %arg6[%c0_11, %c0_12], %12 {strides = array<i32>} : memref<2x128xf32, #tpu.memory_space<vmem>>, vector<2x128xf32>,
    return
  }
  func.func @transform_0(%arg0: i32) -> (i32, i32) {
    %c0_i32 = arith.constant 0 : i32
    %c0_i32_0 = arith.constant 0 : i32
    return %c0_i32, %arg0 : i32, i32
  }
  func.func @transform_1(%arg0: i32) -> (i32, i32) {
    %c0_i32 = arith.constant 0 : i32
    %c0_i32_0 = arith.constant 0 : i32
    %c0_i32_1 = arith.constant 0 : i32
    return %c0_i32, %c0_i32_0 : i32, i32
  }
  func.func @transform_2(%arg0: i32) -> (i32, i32) {
    %c0_i32 = arith.constant 0 : i32
    %c0_i32_0 = arith.constant 0 : i32
    %c0_i32_1 = arith.constant 0 : i32
    return %c0_i32, %c0_i32_0 : i32, i32
  }
  func.func @transform_3(%arg0: i32) -> (i32, i32) {
    %c0_i32 = arith.constant 0 : i32
    %c0_i32_0 = arith.constant 0 : i32
    %c0_i32_1 = arith.constant 0 : i32
    return %c0_i32, %c0_i32_0 : i32, i32
  }
  func.func @transform_4(%arg0: i32) -> (i32, i32) {
    %c0_i32 = arith.constant 0 : i32
    %c0_i32_0 = arith.constant 0 : i32
    %c0_i32_1 = arith.constant 0 : i32
    return %c0_i32, %c0_i32_0 : i32, i32
  }
  func.func @transform_5(%arg0: i32) -> (i32, i32) {
    %c0_i32 = arith.constant 0 : i32
    %c0_i32_0 = arith.constant 0 : i32
    return %c0_i32, %arg0 : i32, i32
  }
}

</mosaic_0001>

<llo_original>
// kernel: tpu_custom_call.1
$region0: #{tpu_custom_call.1}
  #allocation0 [shape = 'u32[]', space=smem, size = 0x4, offset = 0x4, fixed_abs, tag = 'smem constant byte address 0x4 - core index']
  #allocation1 [shape = 'u32[72,128]{1,0:T(1,128)}', space=vmem, size = 0x9000, scoped, tag = 'internal scratch']
  %s0 = inlined_call_operand.vmem [shape: f32[4,128], index: 0, kind: input, shape index: {}]
  %s1 = inlined_call_operand.vmem [shape: f32[256,4], index: 1, kind: input, shape index: {}]
  %s2 = inlined_call_operand.vmem [shape: f32[256,1], index: 2, kind: input, shape index: {}]
  %s3 = inlined_call_operand.vmem [shape: f32[2,256], index: 3, kind: input, shape index: {}]
  %s4 = inlined_call_operand.vmem [shape: f32[2,1], index: 4, kind: input, shape index: {}]
  %s5 = inlined_call_operand.hbm [shape: f32[2,128], index: 5, kind: output, shape index: {}]
  %s6 = sld [smem:[#allocation0]]
  $region30: #{tpu_custom_call.1} parent=0
    _
  %s8 = ssub.s32 1, %s6
  %s9 = scalar_select 0, %s8, %s6
  $region1: #{tpu_custom_call.1} parent=0
    #allocation2 [shape = 'u8[1024]{0}', space=vmem, size = 0x400, scoped, tag = 'output window, operand 0, single buffered']
    #allocation3 [shape = 's32[1]{0}', space=sflag, size = 0x4, scoped, tag = 'scoped memory for tpu_custom_call.1']
    %10 = vsyncpa [#allocation3], 0
    // Predicated region
    $region2: #{tpu_custom_call.1} parent=1 // pred_check
      _
    $region3: #{tpu_custom_call.1} parent=1 // pred_check_branch
      %12 = sbr.rel (0) target = $region5
    $region4: #{tpu_custom_call.1} parent=1 // pred_region
      _
    $region5: #{tpu_custom_call.1} parent=1 // pred_fallthru
      _
    // Predicated region
    $region6: #{tpu_custom_call.1} parent=1 // pred_check
      _
    $region7: #{tpu_custom_call.1} parent=1 // pred_check_branch
      %14 = sbr.rel (0) target = $region9
    $region8: #{tpu_custom_call.1} parent=1 // pred_region
      _
    $region9: #{tpu_custom_call.1} parent=1 // pred_fallthru
      _
    // Predicated region
    $region10: #{tpu_custom_call.1} parent=1 // pred_check
      _
    $region11: #{tpu_custom_call.1} parent=1 // pred_check_branch
      %16 = sbr.rel (0) target = $region13
    $region12: #{tpu_custom_call.1} parent=1 // pred_region
      _
    $region13: #{tpu_custom_call.1} parent=1 // pred_fallthru
      _
    // Predicated region
    $region14: #{tpu_custom_call.1} parent=1 // pred_check
      _
    $region15: #{tpu_custom_call.1} parent=1 // pred_check_branch
      %18 = sbr.rel (0) target = $region17
    $region16: #{tpu_custom_call.1} parent=1 // pred_region
      _
    $region17: #{tpu_custom_call.1} parent=1 // pred_fallthru
      _
    // Predicated region
    $region18: #{tpu_custom_call.1} parent=1 // pred_check
      _
    $region19: #{tpu_custom_call.1} parent=1 // pred_check_branch
      %20 = sbr.rel (0) target = $region21
    $region20: #{tpu_custom_call.1} parent=1 // pred_region
      _
    $region21: #{tpu_custom_call.1} parent=1 // pred_fallthru
      _
    %v21 = vld [vmem:[%s1] sm:$0xff]
    %v22 = vld [vmem:[%s1 + $0x8] sm:$0xff]
    %v23 = vld [vmem:[%s1 + $0x10] sm:$0xff]
    %v24 = vld [vmem:[%s1 + $0x18] sm:$0xff]
    %v25 = vld [vmem:[%s1 + $0x20] sm:$0xff]
    %v26 = vld [vmem:[%s1 + $0x28] sm:$0xff]
    %v27 = vld [vmem:[%s1 + $0x30] sm:$0xff]
    %v28 = vld [vmem:[%s1 + $0x38] sm:$0xff]
    %v29 = vld [vmem:[%s1 + $0x40] sm:$0xff]
    %v30 = vld [vmem:[%s1 + $0x48] sm:$0xff]
    %v31 = vld [vmem:[%s1 + $0x50] sm:$0xff]
    %v32 = vld [vmem:[%s1 + $0x58] sm:$0xff]
    %v33 = vld [vmem:[%s1 + $0x60] sm:$0xff]
    %v34 = vld [vmem:[%s1 + $0x68] sm:$0xff]
    %v35 = vld [vmem:[%s1 + $0x70] sm:$0xff]
    %v36 = vld [vmem:[%s1 + $0x78] sm:$0xff]
    %v37 = vld [vmem:[%s1 + $0x80] sm:$0xff]
    %v38 = vld [vmem:[%s1 + $0x88] sm:$0xff]
    %v39 = vld [vmem:[%s1 + $0x90] sm:$0xff]
    %v40 = vld [vmem:[%s1 + $0x98] sm:$0xff]
    %v41 = vld [vmem:[%s1 + $0xa0] sm:$0xff]
    %v42 = vld [vmem:[%s1 + $0xa8] sm:$0xff]
    %v43 = vld [vmem:[%s1 + $0xb0] sm:$0xff]
    %v44 = vld [vmem:[%s1 + $0xb8] sm:$0xff]
    %v45 = vld [vmem:[%s1 + $0xc0] sm:$0xff]
    %v46 = vld [vmem:[%s1 + $0xc8] sm:$0xff]
    %v47 = vld [vmem:[%s1 + $0xd0] sm:$0xff]
    %v48 = vld [vmem:[%s1 + $0xd8] sm:$0xff]
    %v49 = vld [vmem:[%s1 + $0xe0] sm:$0xff]
    %v50 = vld [vmem:[%s1 + $0xe8] sm:$0xff]
    %v51 = vld [vmem:[%s1 + $0xf0] sm:$0xff]
    %v52 = vld [vmem:[%s1 + $0xf8] sm:$0xff]
    %v53 = vld [vmem:[%s0] sm:$0xf]
    %v54 = vld [vmem:[%s2] sm:$0xff]
    %v55 = vld [vmem:[%s2 + $0x8] sm:$0xff]
    %v56 = vld [vmem:[%s2 + $0x10] sm:$0xff]
    %v57 = vld [vmem:[%s2 + $0x18] sm:$0xff]
    %v58 = vld [vmem:[%s2 + $0x20] sm:$0xff]
    %v59 = vld [vmem:[%s2 + $0x28] sm:$0xff]
    %v60 = vld [vmem:[%s2 + $0x30] sm:$0xff]
    %v61 = vld [vmem:[%s2 + $0x38] sm:$0xff]
    %v62 = vld [vmem:[%s2 + $0x40] sm:$0xff]
    %v63 = vld [vmem:[%s2 + $0x48] sm:$0xff]
    %v64 = vld [vmem:[%s2 + $0x50] sm:$0xff]
    %v65 = vld [vmem:[%s2 + $0x58] sm:$0xff]
    %v66 = vld [vmem:[%s2 + $0x60] sm:$0xff]
    %v67 = vld [vmem:[%s2 + $0x68] sm:$0xff]
    %v68 = vld [vmem:[%s2 + $0x70] sm:$0xff]
    %v69 = vld [vmem:[%s2 + $0x78] sm:$0xff]
    %v70 = vld [vmem:[%s2 + $0x80] sm:$0xff]
    %v71 = vld [vmem:[%s2 + $0x88] sm:$0xff]
    %v72 = vld [vmem:[%s2 + $0x90] sm:$0xff]
    %v73 = vld [vmem:[%s2 + $0x98] sm:$0xff]
    %v74 = vld [vmem:[%s2 + $0xa0] sm:$0xff]
    %v75 = vld [vmem:[%s2 + $0xa8] sm:$0xff]
    %v76 = vld [vmem:[%s2 + $0xb0] sm:$0xff]
    %v77 = vld [vmem:[%s2 + $0xb8] sm:$0xff]
    %v78 = vld [vmem:[%s2 + $0xc0] sm:$0xff]
    %v79 = vld [vmem:[%s2 + $0xc8] sm:$0xff]
    %v80 = vld [vmem:[%s2 + $0xd0] sm:$0xff]
    %v81 = vld [vmem:[%s2 + $0xd8] sm:$0xff]
    %v82 = vld [vmem:[%s2 + $0xe0] sm:$0xff]
    %v83 = vld [vmem:[%s2 + $0xe8] sm:$0xff]
    %v84 = vld [vmem:[%s2 + $0xf0] sm:$0xff]
    %v85 = vld [vmem:[%s2 + $0xf8] sm:$0xff]
    %87 = vset.pattern.permute.xlu0 0
    %88 = vperm.xlu0 %87, %v54
    %v89 = vpop.permute.xlu0 %88
    %92 = vset.pattern.permute.xlu0 0
    %93 = vperm.xlu0 %92, %v55
    %v94 = vpop.permute.xlu0 %93
    %97 = vset.pattern.permute.xlu0 0
    %98 = vperm.xlu0 %97, %v56
    %v99 = vpop.permute.xlu0 %98
    %102 = vset.pattern.permute.xlu0 0
    %103 = vperm.xlu0 %102, %v57
    %v104 = vpop.permute.xlu0 %103
    %107 = vset.pattern.permute.xlu0 0
    %108 = vperm.xlu0 %107, %v58
    %v109 = vpop.permute.xlu0 %108
    %112 = vset.pattern.permute.xlu0 0
    %113 = vperm.xlu0 %112, %v59
    %v114 = vpop.permute.xlu0 %113
    %117 = vset.pattern.permute.xlu0 0
    %118 = vperm.xlu0 %117, %v60
    %v119 = vpop.permute.xlu0 %118
    %122 = vset.pattern.permute.xlu0 0
    %123 = vperm.xlu0 %122, %v61
    %v124 = vpop.permute.xlu0 %123
    %127 = vset.pattern.permute.xlu0 0
    %128 = vperm.xlu0 %127, %v62
    %v129 = vpop.permute.xlu0 %128
    %132 = vset.pattern.permute.xlu0 0
    %133 = vperm.xlu0 %132, %v63
    %v134 = vpop.permute.xlu0 %133
    %137 = vset.pattern.permute.xlu0 0
    %138 = vperm.xlu0 %137, %v64
    %v139 = vpop.permute.xlu0 %138
    %142 = vset.pattern.permute.xlu0 0
    %143 = vperm.xlu0 %142, %v65
    %v144 = vpop.permute.xlu0 %143
    %147 = vset.pattern.permute.xlu0 0
    %148 = vperm.xlu0 %147, %v66
    %v149 = vpop.permute.xlu0 %148
    %152 = vset.pattern.permute.xlu0 0
    %153 = vperm.xlu0 %152, %v67
    %v154 = vpop.permute.xlu0 %153
    %157 = vset.pattern.permute.xlu0 0
    %158 = vperm.xlu0 %157, %v68
    %v159 = vpop.permute.xlu0 %158
    %162 = vset.pattern.permute.xlu0 0
    %163 = vperm.xlu0 %162, %v69
    %v164 = vpop.permute.xlu0 %163
    %167 = vset.pattern.permute.xlu0 0
    %168 = vperm.xlu0 %167, %v70
    %v169 = vpop.permute.xlu0 %168
    %172 = vset.pattern.permute.xlu0 0
    %173 = vperm.xlu0 %172, %v71
    %v174 = vpop.permute.xlu0 %173
    %177 = vset.pattern.permute.xlu0 0
    %178 = vperm.xlu0 %177, %v72
    %v179 = vpop.permute.xlu0 %178
    %182 = vset.pattern.permute.xlu0 0
    %183 = vperm.xlu0 %182, %v73
    %v184 = vpop.permute.xlu0 %183
    %187 = vset.pattern.permute.xlu0 0
    %188 = vperm.xlu0 %187, %v74
    %v189 = vpop.permute.xlu0 %188
    %192 = vset.pattern.permute.xlu0 0
    %193 = vperm.xlu0 %192, %v75
    %v194 = vpop.permute.xlu0 %193
    %197 = vset.pattern.permute.xlu0 0
    %198 = vperm.xlu0 %197, %v76
    %v199 = vpop.permute.xlu0 %198
    %202 = vset.pattern.permute.xlu0 0
    %203 = vperm.xlu0 %202, %v77
    %v204 = vpop.permute.xlu0 %203
    %207 = vset.pattern.permute.xlu0 0
    %208 = vperm.xlu0 %207, %v78
    %v209 = vpop.permute.xlu0 %208
    %212 = vset.pattern.permute.xlu0 0
    %213 = vperm.xlu0 %212, %v79
    %v214 = vpop.permute.xlu0 %213
    %217 = vset.pattern.permute.xlu0 0
    %218 = vperm.xlu0 %217, %v80
    %v219 = vpop.permute.xlu0 %218
    %222 = vset.pattern.permute.xlu0 0
    %223 = vperm.xlu0 %222, %v81
    %v224 = vpop.permute.xlu0 %223
    %227 = vset.pattern.permute.xlu0 0
    %228 = vperm.xlu0 %227, %v82
    %v229 = vpop.permute.xlu0 %228
    %232 = vset.pattern.permute.xlu0 0
    %233 = vperm.xlu0 %232, %v83
    %v234 = vpop.permute.xlu0 %233
    %237 = vset.pattern.permute.xlu0 0
    %238 = vperm.xlu0 %237, %v84
    %v239 = vpop.permute.xlu0 %238
    %242 = vset.pattern.permute.xlu0 0
    %243 = vperm.xlu0 %242, %v85
    %v244 = vpop.permute.xlu0 %243
    %vm246 = vcmask 31744
    %v248 = vsel %vm246, %v21, 0
    %v251 = vsel %vm246, %v22, 0
    %v254 = vsel %vm246, %v23, 0
    %v257 = vsel %vm246, %v24, 0
    %v260 = vsel %vm246, %v25, 0
    %v263 = vsel %vm246, %v26, 0
    %v266 = vsel %vm246, %v27, 0
    %v269 = vsel %vm246, %v28, 0
    %v272 = vsel %vm246, %v29, 0
    %v275 = vsel %vm246, %v30, 0
    %v278 = vsel %vm246, %v31, 0
    %v281 = vsel %vm246, %v32, 0
    %v284 = vsel %vm246, %v33, 0
    %v287 = vsel %vm246, %v34, 0
    %v290 = vsel %vm246, %v35, 0
    %v293 = vsel %vm246, %v36, 0
    %v296 = vsel %vm246, %v37, 0
    %v299 = vsel %vm246, %v38, 0
    %v302 = vsel %vm246, %v39, 0
    %v305 = vsel %vm246, %v40, 0
    %v308 = vsel %vm246, %v41, 0
    %v311 = vsel %vm246, %v42, 0
    %v314 = vsel %vm246, %v43, 0
    %v317 = vsel %vm246, %v44, 0
    %v320 = vsel %vm246, %v45, 0
    %v323 = vsel %vm246, %v46, 0
    %v326 = vsel %vm246, %v47, 0
    %v329 = vsel %vm246, %v48, 0
    %v332 = vsel %vm246, %v49, 0
    %v335 = vsel %vm246, %v50, 0
    %v338 = vsel %vm246, %v51, 0
    %v341 = vsel %vm246, %v52, 0
    %vm343 = vcmask 1043456
    %v345 = vsel %vm343, %v53, 0
    %347 = vmatpush.msra.mxu0 0.0
    %348 = vmatpush.msra.mxu0 0.0
    %349 = vmatpush.msra.mxu0 0.0
    %350 = vmatpush.msra.mxu0 0.0
    %351 = vmatpush.msra.mxu0 0.0
    %352 = vmatpush.msra.mxu0 0.0
    %353 = vmatpush.msra.mxu0 0.0
    %354 = vmatpush.msra.mxu0 0.0
    %355 = vmatpush.msra.mxu0 0.0
    %356 = vmatpush.msra.mxu0 0.0
    %357 = vmatpush.msra.mxu0 0.0
    %358 = vmatpush.msra.mxu0 0.0
    %359 = vmatpush.msra.mxu0 0.0
    %360 = vmatpush.msra.mxu0 0.0
    %361 = vmatpush.msra.mxu0 0.0
    %362 = vmatpush.msra.mxu0 %v345
    %363 = vmatmul.f32.gmra.mxu0 %v248
    %v364 = vpop.f32.mrf.mxu0
    %v365 = vadd.f32 %v89, %v364
    %366 = vmatmul.f32.gmra.mxu0 %v251
    %v367 = vpop.f32.mrf.mxu0
    %v368 = vadd.f32 %v94, %v367
    %369 = vmatmul.f32.gmra.mxu0 %v254
    %v370 = vpop.f32.mrf.mxu0
    %v371 = vadd.f32 %v99, %v370
    %372 = vmatmul.f32.gmra.mxu0 %v257
    %v373 = vpop.f32.mrf.mxu0
    %v374 = vadd.f32 %v104, %v373
    %375 = vmatmul.f32.gmra.mxu0 %v260
    %v376 = vpop.f32.mrf.mxu0
    %v377 = vadd.f32 %v109, %v376
    %378 = vmatmul.f32.gmra.mxu0 %v263
    %v379 = vpop.f32.mrf.mxu0
    %v380 = vadd.f32 %v114, %v379
    %381 = vmatmul.f32.gmra.mxu0 %v266
    %v382 = vpop.f32.mrf.mxu0
    %v383 = vadd.f32 %v119, %v382
    %384 = vmatmul.f32.gmra.mxu0 %v269
    %v385 = vpop.f32.mrf.mxu0
    %v386 = vadd.f32 %v124, %v385
    %387 = vmatmul.f32.gmra.mxu0 %v272
    %v388 = vpop.f32.mrf.mxu0
    %v389 = vadd.f32 %v129, %v388
    %390 = vmatmul.f32.gmra.mxu0 %v275
    %v391 = vpop.f32.mrf.mxu0
    %v392 = vadd.f32 %v134, %v391
    %393 = vmatmul.f32.gmra.mxu0 %v278
    %v394 = vpop.f32.mrf.mxu0
    %v395 = vadd.f32 %v139, %v394
    %396 = vmatmul.f32.gmra.mxu0 %v281
    %v397 = vpop.f32.mrf.mxu0
    %v398 = vadd.f32 %v144, %v397
    %399 = vmatmul.f32.gmra.mxu0 %v284
    %v400 = vpop.f32.mrf.mxu0
    %v401 = vadd.f32 %v149, %v400
    %402 = vmatmul.f32.gmra.mxu0 %v287
    %v403 = vpop.f32.mrf.mxu0
    %v404 = vadd.f32 %v154, %v403
    %405 = vmatmul.f32.gmra.mxu0 %v290
    %v406 = vpop.f32.mrf.mxu0
    %v407 = vadd.f32 %v159, %v406
    %408 = vmatmul.f32.gmra.mxu0 %v293
    %v409 = vpop.f32.mrf.mxu0
    %v410 = vadd.f32 %v164, %v409
    %411 = vmatmul.f32.gmra.mxu0 %v296
    %v412 = vpop.f32.mrf.mxu0
    %v413 = vadd.f32 %v169, %v412
    %414 = vmatmul.f32.gmra.mxu0 %v299
    %v415 = vpop.f32.mrf.mxu0
    %v416 = vadd.f32 %v174, %v415
    %417 = vmatmul.f32.gmra.mxu0 %v302
    %v418 = vpop.f32.mrf.mxu0
    %v419 = vadd.f32 %v179, %v418
    %420 = vmatmul.f32.gmra.mxu0 %v305
    %v421 = vpop.f32.mrf.mxu0
    %v422 = vadd.f32 %v184, %v421
    %423 = vmatmul.f32.gmra.mxu0 %v308
    %v424 = vpop.f32.mrf.mxu0
    %v425 = vadd.f32 %v189, %v424
    %426 = vmatmul.f32.gmra.mxu0 %v311
    %v427 = vpop.f32.mrf.mxu0
    %v428 = vadd.f32 %v194, %v427
    %429 = vmatmul.f32.gmra.mxu0 %v314
    %v430 = vpop.f32.mrf.mxu0
    %v431 = vadd.f32 %v199, %v430
    %432 = vmatmul.f32.gmra.mxu0 %v317
    %v433 = vpop.f32.mrf.mxu0
    %v434 = vadd.f32 %v204, %v433
    %435 = vmatmul.f32.gmra.mxu0 %v320
    %v436 = vpop.f32.mrf.mxu0
    %v437 = vadd.f32 %v209, %v436
    %438 = vmatmul.f32.gmra.mxu0 %v323
    %v439 = vpop.f32.mrf.mxu0
    %v440 = vadd.f32 %v214, %v439
    %441 = vmatmul.f32.gmra.mxu0 %v326
    %v442 = vpop.f32.mrf.mxu0
    %v443 = vadd.f32 %v219, %v442
    %444 = vmatmul.f32.gmra.mxu0 %v329
    %v445 = vpop.f32.mrf.mxu0
    %v446 = vadd.f32 %v224, %v445
    %447 = vmatmul.f32.gmra.mxu0 %v332
    %v448 = vpop.f32.mrf.mxu0
    %v449 = vadd.f32 %v229, %v448
    %450 = vmatmul.f32.gmra.mxu0 %v335
    %v451 = vpop.f32.mrf.mxu0
    %v452 = vadd.f32 %v234, %v451
    %453 = vmatmul.f32.gmra.mxu0 %v338
    %v454 = vpop.f32.mrf.mxu0
    %v455 = vadd.f32 %v239, %v454
    %456 = vmatmul.f32.gmra.mxu0 %v341
    %v457 = vpop.f32.mrf.mxu0
    %v458 = vadd.f32 %v244, %v457
    %459 = vdwg.mxu0
    %v460 = vmax.f32 %v365, 0.0
    %v461 = vmax.f32 %v368, 0.0
    %v462 = vmax.f32 %v371, 0.0
    %v463 = vmax.f32 %v374, 0.0
    %v464 = vmax.f32 %v377, 0.0
    %v465 = vmax.f32 %v380, 0.0
    %v466 = vmax.f32 %v383, 0.0
    %v467 = vmax.f32 %v386, 0.0
    %v468 = vmax.f32 %v389, 0.0
    %v469 = vmax.f32 %v392, 0.0
    %v470 = vmax.f32 %v395, 0.0
    %v471 = vmax.f32 %v398, 0.0
    %v472 = vmax.f32 %v401, 0.0
    %v473 = vmax.f32 %v404, 0.0
    %v474 = vmax.f32 %v407, 0.0
    %v475 = vmax.f32 %v410, 0.0
    %v476 = vmax.f32 %v413, 0.0
    %v477 = vmax.f32 %v416, 0.0
    %v478 = vmax.f32 %v419, 0.0
    %v479 = vmax.f32 %v422, 0.0
    %v480 = vmax.f32 %v425, 0.0
    %v481 = vmax.f32 %v428, 0.0
    %v482 = vmax.f32 %v431, 0.0
    %v483 = vmax.f32 %v434, 0.0
    %v484 = vmax.f32 %v437, 0.0
    %v485 = vmax.f32 %v440, 0.0
    %v486 = vmax.f32 %v443, 0.0
    %v487 = vmax.f32 %v446, 0.0
    %v488 = vmax.f32 %v449, 0.0
    %v489 = vmax.f32 %v452, 0.0
    %v490 = vmax.f32 %v455, 0.0
    %v491 = vmax.f32 %v458, 0.0
    %v492 = vld [vmem:[%s3] sm:$0xf]
    %v493 = vld [vmem:[%s4] sm:$0x3]
    %495 = vset.pattern.permute.xlu0 0
    %496 = vperm.xlu0 %495, %v493
    %v497 = vpop.permute.xlu0 %496
    %500 = vst [vmem:[#allocation1] ss:$4 sm:$0xff] %v492
    %v501 = vld.sshfl [vmem:[#allocation1] sm:$0xff pattern:$0x73625140]
    %v502 = vld.sshfl [vmem:[#allocation1 + $0x8] sm:$0xff pattern:$0x73625140]
    %505 = vmatpush.msra.mxu0 %v475
    %506 = vmatpush.msra.mxu0 %v474
    %507 = vmatpush.msra.mxu0 %v473
    %508 = vmatpush.msra.mxu0 %v472
    %509 = vmatpush.msra.mxu0 %v471
    %510 = vmatpush.msra.mxu0 %v470
    %511 = vmatpush.msra.mxu0 %v469
    %512 = vmatpush.msra.mxu0 %v468
    %513 = vmatpush.msra.mxu0 %v467
    %514 = vmatpush.msra.mxu0 %v466
    %515 = vmatpush.msra.mxu0 %v465
    %516 = vmatpush.msra.mxu0 %v464
    %517 = vmatpush.msra.mxu0 %v463
    %518 = vmatpush.msra.mxu0 %v462
    %519 = vmatpush.msra.mxu0 %v461
    %520 = vmatpush.msra.mxu0 %v460
    %521 = vmatmul.f32.gmra.mxu0 %v501
    %v522 = vpop.f32.mrf.mxu0
    %v523 = vadd.f32 %v497, %v522
    %524 = vdwg.mxu0
    %525 = vmatpush.msra.mxu0 %v491
    %526 = vmatpush.msra.mxu0 %v490
    %527 = vmatpush.msra.mxu0 %v489
    %528 = vmatpush.msra.mxu0 %v488
    %529 = vmatpush.msra.mxu0 %v487
    %530 = vmatpush.msra.mxu0 %v486
    %531 = vmatpush.msra.mxu0 %v485
    %532 = vmatpush.msra.mxu0 %v484
    %533 = vmatpush.msra.mxu0 %v483
    %534 = vmatpush.msra.mxu0 %v482
    %535 = vmatpush.msra.mxu0 %v481
    %536 = vmatpush.msra.mxu0 %v480
    %537 = vmatpush.msra.mxu0 %v479
    %538 = vmatpush.msra.mxu0 %v478
    %539 = vmatpush.msra.mxu0 %v477
    %540 = vmatpush.msra.mxu0 %v476
    %541 = vmatmul.f32.gmra.mxu0 %v502
    %v542 = vpop.f32.mrf.mxu0
    %v543 = vadd.f32 %v523, %v542
    %544 = vdwg.mxu0
    %545 = vst [vmem:[#allocation2] sm:$0x3] %v543
    // Predicated region
    $region22: #{tpu_custom_call.1} parent=1 // pred_check
      _
    $region23: #{tpu_custom_call.1} parent=1 // pred_check_branch
      %547 = sbr.rel (0) target = $region25
    $region24: #{tpu_custom_call.1} parent=1 // pred_region
      %549 = vsyncadd [#allocation3], 0
      %s551 = sshll.u32 [#allocation2], 4
      %s552 = int_to_ptr.vmem [resolvable:$true] %s551
      %s553 = sshll.u32 %s5, 4
      %s554 = int_to_ptr.hbm [resolvable:$true] %s553
      %556 = dma.vmem_to_hbm [thread:$0]  %s552, 32, %s554, [#allocation3]
    $region25: #{tpu_custom_call.1} parent=1 // pred_fallthru
      _
    // Predicated region
    $region26: #{tpu_custom_call.1} parent=1 // pred_check
      _
    $region27: #{tpu_custom_call.1} parent=1 // pred_check_branch
      %558 = sbr.rel (0) target = $region29
    $region28: #{tpu_custom_call.1} parent=1 // pred_region
      %560 = dma.done [#allocation3], 32
    $region29: #{tpu_custom_call.1} parent=1 // pred_fallthru
      _
    %561 = vsyncpa [#allocation3], 1

</llo_original>
